<compile_context>
chip_gen: v6e
topology: v6e:2x2x1
jax: 0.10.0
libtpu: 0.0.40
codegen_flags: <defaults>
</compile_context>

<pallas_src>
import jax
import jax.numpy as jnp
from jax import lax
from jax.experimental import pallas as pl
from jax.experimental.pallas import tpu as pltpu


def _round_up(x, m):
    return ((x + m - 1) // m) * m


# ----------------------------- kernels ------------------------------------- #

def _linear_kernel(x_ref, w_ref, b_ref, o_ref):
    # x: (TM, in_dim) f32 (cast to bf16 in-register), w: (in_dim, n_cls) bf16
    # resident, b: (1, n_cls) f32 resident.
    x = x_ref[...].astype(jnp.bfloat16)
    acc = jnp.dot(x, w_ref[...], preferred_element_type=jnp.float32)
    o_ref[...] = (acc + b_ref[...]).astype(o_ref.dtype)


def _linear_softmax_kernel(x_ref, w_ref, b_ref, o_ref):
    x = x_ref[...].astype(jnp.bfloat16)
    logits = jnp.dot(x, w_ref[...], preferred_element_type=jnp.float32) + b_ref[...]
    m = jnp.max(logits, axis=-1, keepdims=True)
    p = jnp.exp(logits - m)                       # EUP
    s = jnp.sum(p, axis=-1, keepdims=True)        # XLU
    o_ref[...] = (p * pl.reciprocal(s, approx=False)).astype(o_ref.dtype)


def _linear_argmax_kernel(x_ref, w_ref, b_ref, o_ref):
    # forward_labels: argmax(softmax(logits)) == argmax(logits), so skip softmax.
    x = x_ref[...].astype(jnp.bfloat16)
    logits = jnp.dot(x, w_ref[...], preferred_element_type=jnp.float32) + b_ref[...]
    n_cls = logits.shape[-1]
    m = jnp.max(logits, axis=-1, keepdims=True)
    col = lax.broadcasted_iota(jnp.int32, logits.shape, 1)
    idx = jnp.min(jnp.where(logits == m, col, n_cls), axis=-1, keepdims=True)
    o_ref[...] = idx.astype(o_ref.dtype)


# ----------------------------- sizing -------------------------------------- #

def _vmem_budget():
    """(tile budget, vmem_limit_bytes) per TPU generation."""
    try:
        cap = pltpu.get_tpu_info().vmem_capacity_bytes
    except Exception:
        cap = 64 * 1024 * 1024                      # conservative default
    if cap >= 128 * 1024 * 1024:                    # v5e / v6e: 128 MiB
        return 64 * 1024 * 1024, 96 * 1024 * 1024
    return 32 * 1024 * 1024, 48 * 1024 * 1024       # v7x: 64 MiB per TensorCore


def _choose_tm(B, in_dim, n_cls, budget):
    """Largest batch tile whose pipelined footprint fits the VMEM budget."""
    def footprint(t):
        return (2 * t * in_dim * 4        # double-buffered f32 x tile
                + 2 * in_dim * n_cls * 2  # resident bf16 W (default 2x buffering)
                + 2 * n_cls * 4           # resident f32 bias
                + 2 * t * n_cls * 4)      # double-buffered output tile
    tm = 4096
    while tm > 16 and footprint(tm) > budget:
        tm //= 2
    if footprint(tm) > budget:
        # TODO(synk): K-split accumulator path for in_dim too large to keep the
        # weight block resident in VMEM.
        raise NotImplementedError("in_dim too large for resident-weight kernel")
    if B >= 8 * 128:
        # At least ~8 grid steps: pipelining + megacore sharding on v7x.
        tm = min(tm, max(128, _round_up(pl.cdiv(B, 8), 16)))
    tm = min(tm, _round_up(B, 16) if B >= 16 else _round_up(B, 8))
    return max(8, tm)


# ----------------------------- wrapper ------------------------------------- #

def prepare_params(w, b):
    """One-time prep: PyTorch (n_cls, in_dim) W -> (in_dim, n_cls) bf16, bias row."""
    w_t = jnp.transpose(jnp.asarray(w)).astype(jnp.bfloat16)
    b_row = jnp.asarray(b, jnp.float32).reshape(1, -1)
    return w_t, b_row


def _run(kernel_fn, x, w_t, b_row, out_cols, out_dtype, transcendentals=0):
    B, in_dim = x.shape
    n_cls = w_t.shape[1]
    budget, vmem_limit = _vmem_budget()
    tm = _choose_tm(B, in_dim, n_cls, budget)
    grid = (pl.cdiv(B, tm),)

    cost = pl.CostEstimate(
        flops=2 * B * in_dim * n_cls,
        transcendentals=transcendentals * B * n_cls,
        bytes_accessed=(x.size * x.dtype.itemsize + w_t.size * 2 + b_row.size * 4
                        + B * out_cols * jnp.dtype(out_dtype).itemsize),
    )

    return pl.pallas_call(
        kernel_fn,
        out_shape=jax.ShapeDtypeStruct((B, out_cols), out_dtype),
        grid=grid,
        in_specs=[
            pl.BlockSpec((tm, in_dim), lambda i: (i, 0)),      # streamed x tiles
            pl.BlockSpec((in_dim, n_cls), lambda i: (0, 0)),   # resident weights
            pl.BlockSpec((1, n_cls), lambda i: (0, 0)),        # resident bias
        ],
        out_specs=pl.BlockSpec((tm, out_cols), lambda i: (i, 0)),
        compiler_params=pltpu.CompilerParams(
            dimension_semantics=("parallel",),                 # megacore on v7x
            vmem_limit_bytes=vmem_limit,
        ),
        cost_estimate=cost,
    )(x, w_t, b_row)


def lr_forward(x, w_t, b_row):
    """LRModel.forward: logits = x @ W.T + b (prepared params)."""
    return _run(_linear_kernel, x, w_t, b_row, w_t.shape[1], jnp.float32)


def lr_forward_proba(x, w_t, b_row):
    """LRModel.forward_proba: softmax(dim=1) fused into the kernel epilogue."""
    return _run(_linear_softmax_kernel, x, w_t, b_row, w_t.shape[1], jnp.float32,
                transcendentals=1)


def lr_forward_labels(x, w_t, b_row):
    """LRModel.forward_labels: argmax fused in-kernel (softmax-invariant)."""
    return _run(_linear_argmax_kernel, x, w_t, b_row, 1, jnp.int32)[:, 0]


# ------------------------------- demo --------------------------------------- #

if __name__ == "__main__":
    B, in_dim, n_classes = 8, 32, 8

    key = jax.random.PRNGKey(0)
    kx, kw, kb = jax.random.split(key, 3)

    # Deterministic init mimicking PyTorch nn.Linear: U(-1/sqrt(in_dim), +)
    bound = 1.0 / jnp.sqrt(jnp.float32(in_dim))
    w = jax.random.uniform(kw, (n_classes, in_dim), jnp.float32, -bound, bound)
    b = jax.random.uniform(kb, (n_classes,), jnp.float32, -bound, bound)
    x = jax.random.normal(kx, (B, in_dim), jnp.float32)

    w_t, b_row = prepare_params(w, b)       # one-time weight prep (hoisted)

    logits = lr_forward(x, w_t, b_row)
    jax.block_until_ready(logits)

    # Reference with the same bf16-rounded operands, f32 accumulate (MXU path).
    x_bf = x.astype(jnp.bfloat16).astype(jnp.float32)
    w_bf = w.astype(jnp.bfloat16).astype(jnp.float32)
    ref = x_bf @ w_bf.T + b

    assert logits.shape == (B, n_classes)
    assert jnp.allclose(logits, ref, atol=1e-3, rtol=1e-3)

    probs = lr_forward_proba(x, w_t, b_row)
    jax.block_until_ready(probs)
    ref_probs = jax.nn.softmax(ref, axis=1)
    assert probs.shape == (B, n_classes)
    assert jnp.allclose(jnp.sum(probs, axis=1), 1.0, atol=1e-3)
    assert jnp.allclose(probs, ref_probs, atol=2e-3)

    labels = lr_forward_labels(x, w_t, b_row)
    jax.block_until_ready(labels)
    assert labels.shape == (B,)
    assert jnp.array_equal(labels, jnp.argmax(ref, axis=1))

    print("KERNEL_OK")
</pallas_src>

<mosaic_0001>
module attributes {stable_mosaic.version = 11 : i64} {
  func.func @_linear_kernel(%arg0: i32, %arg1: memref<8x32xf32, #tpu.memory_space<vmem>>, %arg2: memref<32x8xbf16, #tpu.memory_space<vmem>>, %arg3: memref<1x8xf32, #tpu.memory_space<vmem>>, %arg4: memref<8x8xf32, #tpu.memory_space<vmem>>) attributes {dimension_semantics = [#tpu.dimension_semantics<parallel>], iteration_bounds = array<i64: 1>, scalar_prefetch = 0 : i64, scratch_operands = 0 : i64, tpu.core_type = #tpu.core_type<tc>, window_params = [{transform_indices = @transform_0, window_bounds = array<i64: 8, 32>}, {pipeline_mode = #tpu.pipeline_mode<synchronous>, transform_indices = @transform_1, window_bounds = array<i64: 32, 8>}, {pipeline_mode = #tpu.pipeline_mode<synchronous>, transform_indices = @transform_2, window_bounds = array<i64: 1, 8>}, {transform_indices = @transform_3, window_bounds = array<i64: 8, 8>}]} {
    %c0 = arith.constant 0 : index
    %c0_0 = arith.constant 0 : index
    %0 = vector.load %arg1[%c0, %c0_0] : memref<8x32xf32, #tpu.memory_space<vmem>>, vector<8x32xf32>
    %1 = arith.truncf %0 : vector<8x32xf32> to vector<8x32xbf16>
    %c0_1 = arith.constant 0 : index
    %c0_2 = arith.constant 0 : index
    %2 = vector.load %arg2[%c0_1, %c0_2] : memref<32x8xbf16, #tpu.memory_space<vmem>>, vector<32x8xbf16>
    %cst = arith.constant dense<0.000000e+00> : vector<8x8xf32>
    %3 = tpu.matmul %1, %2, %cst {dimension_numbers = #tpu.dot_dimension_numbers<[1], [0], [0], [1], [0, 0, 1, 1], [], []>} : vector<8x32xbf16>, vector<32x8xbf16>, vector<8x8xf32> -> vector<8x8xf32>
    %c0_3 = arith.constant 0 : index
    %c0_4 = arith.constant 0 : index
    %4 = vector.load %arg3[%c0_3, %c0_4] : memref<1x8xf32, #tpu.memory_space<vmem>>, vector<1x8xf32>
    %5 = vector.broadcast %4 : vector<1x8xf32> to vector<8x8xf32>
    %6 = arith.addf %3, %5 : vector<8x8xf32>
    %c0_5 = arith.constant 0 : index
    %c0_6 = arith.constant 0 : index
    %7 = vector.load %arg4[%c0_5, %c0_6] : memref<8x8xf32, #tpu.memory_space<vmem>>, vector<8x8xf32>
    tpu.vector_store %arg4[%c0_5, %c0_6], %6 {strides = array<i32>} : memref<8x8xf32, #tpu.memory_space<vmem>>, vector<8x8xf32>,
    return
  }
  func.func @transform_0(%arg0: i32) -> (i32, i32) {
    %c0_i32 = arith.constant 0 : i32
    %c0_i32_0 = arith.constant 0 : i32
    return %arg0, %c0_i32 : i32, i32
  }
  func.func @transform_1(%arg0: i32) -> (i32, i32) {
    %c0_i32 = arith.constant 0 : i32
    %c0_i32_0 = arith.constant 0 : i32
    %c0_i32_1 = arith.constant 0 : i32
    return %c0_i32, %c0_i32_0 : i32, i32
  }
  func.func @transform_2(%arg0: i32) -> (i32, i32) {
    %c0_i32 = arith.constant 0 : i32
    %c0_i32_0 = arith.constant 0 : i32
    %c0_i32_1 = arith.constant 0 : i32
    return %c0_i32, %c0_i32_0 : i32, i32
  }
  func.func @transform_3(%arg0: i32) -> (i32, i32) {
    %c0_i32 = arith.constant 0 : i32
    %c0_i32_0 = arith.constant 0 : i32
    return %arg0, %c0_i32 : i32, i32
  }
}

</mosaic_0001>

<llo_original>
// kernel: tpu_custom_call.1
$region0: #{tpu_custom_call.1}
  #allocation0 [shape = 'u32[]', space=smem, size = 0x4, offset = 0x4, fixed_abs, tag = 'smem constant byte address 0x4 - core index']
  #allocation1 [shape = 'u32[144,128]{1,0:T(1,128)}', space=vmem, size = 0x12000, scoped, tag = 'internal scratch']
  %s0 = inlined_call_operand.vmem [shape: f32[8,32], index: 0, kind: input, shape index: {}]
  %s1 = inlined_call_operand.vmem [shape: bf16[32,8], index: 1, kind: input, shape index: {}]
  %s2 = inlined_call_operand.vmem [shape: f32[1,8], index: 2, kind: input, shape index: {}]
  %s3 = inlined_call_operand.hbm [shape: f32[8,8], index: 3, kind: output, shape index: {}]
  %s4 = sld [smem:[#allocation0]]
  $region22: #{tpu_custom_call.1} parent=0
    _
  %s6 = ssub.s32 1, %s4
  %s7 = scalar_select 0, %s6, %s4
  $region1: #{tpu_custom_call.1} parent=0
    #allocation2 [shape = 'u8[4096]{0}', space=vmem, size = 0x1000, scoped, tag = 'output window, operand 0, single buffered']
    #allocation3 [shape = 's32[1]{0}', space=sflag, size = 0x4, scoped, tag = 'scoped memory for tpu_custom_call.1']
    %8 = vsyncpa [#allocation3], 0
    // Predicated region
    $region2: #{tpu_custom_call.1} parent=1 // pred_check
      _
    $region3: #{tpu_custom_call.1} parent=1 // pred_check_branch
      %10 = sbr.rel (0) target = $region5
    $region4: #{tpu_custom_call.1} parent=1 // pred_region
      _
    $region5: #{tpu_custom_call.1} parent=1 // pred_fallthru
      _
    // Predicated region
    $region6: #{tpu_custom_call.1} parent=1 // pred_check
      _
    $region7: #{tpu_custom_call.1} parent=1 // pred_check_branch
      %12 = sbr.rel (0) target = $region9
    $region8: #{tpu_custom_call.1} parent=1 // pred_region
      _
    $region9: #{tpu_custom_call.1} parent=1 // pred_fallthru
      _
    // Predicated region
    $region10: #{tpu_custom_call.1} parent=1 // pred_check
      _
    $region11: #{tpu_custom_call.1} parent=1 // pred_check_branch
      %14 = sbr.rel (0) target = $region13
    $region12: #{tpu_custom_call.1} parent=1 // pred_region
      _
    $region13: #{tpu_custom_call.1} parent=1 // pred_fallthru
      _
    %v16 = vld [vmem:[%s0] sm:$0xff]
    %v17 = vpack.c.bf16 %v16, %v16
    %v18 = vld [vmem:[%s1] sm:$0xf]
    %v19 = vld [vmem:[%s1 + $0x4] sm:$0xf]
    %v20 = vld [vmem:[%s1 + $0x8] sm:$0xf]
    %v21 = vld [vmem:[%s1 + $0xc] sm:$0xf]
    %v22 = vld [vmem:[%s2] sm:$0x1]
    %v24 = vlaneseq
    %v25 = vshrl.u32 %v24, 7
    %v26 = vsub.s32 0, %v25
    %v27 = vrot.slane %v22, %v26
    %v33 = vunpack.c.l.b16 %v18
    %v34 = vunpack.c.l.b16 %v19
    %v35 = vunpack.c.l.b16 %v20
    %v36 = vunpack.c.l.b16 %v21
    %v37 = vpack.c.b16 %v34, %v33
    %v38 = vpack.c.b16 %v36, %v35
    %vm41 = vcmask 261120
    %v43 = vsel %vm41, %v17, 0
    %45 = vmatprep.subr.bf16.mxu0 0
    %46 = vmatpush1.bf16.msra.mxu0 0
    %47 = vmatprep.subr.bf16.mxu0 0
    %48 = vmatpush1.bf16.msra.mxu0 0
    %49 = vmatprep.subr.bf16.mxu0 0
    %50 = vmatpush1.bf16.msra.mxu0 0
    %51 = vmatprep.subr.bf16.mxu0 0
    %52 = vmatpush1.bf16.msra.mxu0 0
    %53 = vmatprep.subr.bf16.mxu0 0
    %54 = vmatpush1.bf16.msra.mxu0 0
    %55 = vmatprep.subr.bf16.mxu0 0
    %56 = vmatpush1.bf16.msra.mxu0 0
    %57 = vmatprep.subr.bf16.mxu0 0
    %58 = vmatpush1.bf16.msra.mxu0 %v38
    %59 = vmatprep.subr.bf16.mxu0 0
    %60 = vmatpush1.bf16.msra.mxu0 %v37
    %61 = vmatprep.subr.bf16.mxu0 0
    %62 = vmatpush2.bf16.msra.mxu0 0
    %63 = vmatprep.subr.bf16.mxu0 0
    %64 = vmatpush2.bf16.msra.mxu0 0
    %65 = vmatprep.subr.bf16.mxu0 0
    %66 = vmatpush2.bf16.msra.mxu0 0
    %67 = vmatprep.subr.bf16.mxu0 0
    %68 = vmatpush2.bf16.msra.mxu0 0
    %69 = vmatprep.subr.bf16.mxu0 0
    %70 = vmatpush2.bf16.msra.mxu0 0
    %71 = vmatprep.subr.bf16.mxu0 0
    %72 = vmatpush2.bf16.msra.mxu0 0
    %73 = vmatprep.subr.bf16.mxu0 0
    %74 = vmatpush2.bf16.msra.mxu0 0
    %75 = vmatprep.subr.bf16.mxu0 0
    %76 = vmatpush2.bf16.msra.mxu0 0
    %77 = vmatprep.mubr.bf16.mxu0 0
    %78 = vmatmul.mubr.bf16.gmra.mxu0 %v43
    %v79 = vpop.f32.mrf.mxu0
    %v80 = vadd.f32 %v27, %v79
    %v81 = vpop.f32.mrf.mxu0
    %v82 = vpop.f32.mrf.mxu0
    %v83 = vpop.f32.mrf.mxu0
    %84 = vdwg.mxu0
    %vm85 = vcmask 64512
    %86 = vst.msk [vmem:[#allocation2] sm:$0xff] %vm85, %v80
    // Predicated region
    $region14: #{tpu_custom_call.1} parent=1 // pred_check
      _
    $region15: #{tpu_custom_call.1} parent=1 // pred_check_branch
      %88 = sbr.rel (0) target = $region17
    $region16: #{tpu_custom_call.1} parent=1 // pred_region
      %s90 = ssub.s32 128, 128
      %91 = vsyncadd [#allocation3], %s90
      %s93 = sshll.u32 [#allocation2], 4
      %s94 = int_to_ptr.vmem [resolvable:$true] %s93
      %96 = dma.vmem_to_hbm [thread:$0]  %s94, 128, %s3, [#allocation3]
    $region17: #{tpu_custom_call.1} parent=1 // pred_fallthru
      _
    // Predicated region
    $region18: #{tpu_custom_call.1} parent=1 // pred_check
      _
    $region19: #{tpu_custom_call.1} parent=1 // pred_check_branch
      %98 = sbr.rel (0) target = $region21
    $region20: #{tpu_custom_call.1} parent=1 // pred_region
      %99 = dma.done [#allocation3], 128
    $region21: #{tpu_custom_call.1} parent=1 // pred_fallthru
      _
    %100 = vsyncpa [#allocation3], 1

</llo_original>
